<compile_context>
chip_gen: v7x
topology: tpu7x:2x2x1
jax: 0.10.0
libtpu: 0.0.40
codegen_flags: <defaults>
</compile_context>

<pallas_src>
import functools

import jax
import jax.numpy as jnp
from jax.experimental import pallas as pl
from jax.experimental.pallas import tpu as pltpu


def _round_up(x, m):
    return ((x + m - 1) // m) * m


def dqn_mlp_kernel(x_ref, w1_ref, w2_ref, w3_ref, b_ref, o_ref, *, fc1, fc2, n_pad):
    """Fused 3-layer MLP forward for one TM-row batch tile (all weights VMEM-resident)."""
    x = x_ref[...]

    # Static slices of the packed bias row (lane-tile aligned: fc1/fc2/n_pad are x128).
    b1 = b_ref[:, 0:fc1]
    b2 = b_ref[:, fc1:fc1 + fc2]
    b3 = b_ref[:, fc1 + fc2:fc1 + fc2 + n_pad]

    # fc1 + ReLU  (bf16 MXU operands, f32 accumulation, f32 elementwise)
    h1 = jnp.dot(x.astype(jnp.bfloat16), w1_ref[...],
                 preferred_element_type=jnp.float32) + b1
    h1 = jnp.maximum(h1, 0.0)

    # fc2 + ReLU
    h2 = jnp.dot(h1.astype(jnp.bfloat16), w2_ref[...],
                 preferred_element_type=jnp.float32) + b2
    h2 = jnp.maximum(h2, 0.0)

    # fc3 (action values, no activation); lane-dense padded output.
    out = jnp.dot(h2.astype(jnp.bfloat16), w3_ref[...],
                  preferred_element_type=jnp.float32) + b3
    o_ref[...] = out.astype(o_ref.dtype)


def dqnetwork_forward(state, params, *, tm=None):
    """DQNetwork forward pass via one Pallas kernel (grid over the batch dim).

    state:  (batch, inputDims) float32
    params: dict with
      w1 (in, fc1)   bf16, w2 (fc1, fc2) bf16, w3 (fc2, nA_pad) bf16 (zero-padded cols),
      b  (1, fc1+fc2+nA_pad) float32 packed biases (b3 zero-padded),
      n_actions: true (unpadded) action count.
    Returns (batch, n_actions) float32 action values.
    """
    batch, in_dims = state.shape
    fc1 = params["w1"].shape[1]
    fc2 = params["w2"].shape[1]
    n_pad = params["w3"].shape[1]
    n_actions = params["n_actions"]

    # Batch tile: big tiles when the batch is big (better HBM/grid-step
    # amortization), otherwise a single sublane-aligned tile.
    if tm is None:
        if batch >= 512:
            tm = 512
        elif batch >= 128:
            tm = 128
        else:
            tm = _round_up(batch, 8)
    b_pad = _round_up(batch, tm)
    if b_pad != batch:
        state = jnp.pad(state, ((0, b_pad - batch), (0, 0)))

    grid = (b_pad // tm,)

    kernel = functools.partial(dqn_mlp_kernel, fc1=fc1, fc2=fc2, n_pad=n_pad)

    param_bytes = sum(int(params[k].size) * params[k].dtype.itemsize
                      for k in ("w1", "w2", "w3", "b"))
    cost = pl.CostEstimate(
        flops=2 * b_pad * (in_dims * fc1 + fc1 * fc2 + fc2 * n_pad),
        transcendentals=0,
        bytes_accessed=(state.size * state.dtype.itemsize
                        + param_bytes
                        + b_pad * n_pad * 4),
    )

    out = pl.pallas_call(
        kernel,
        out_shape=jax.ShapeDtypeStruct((b_pad, n_pad), jnp.float32),
        grid=grid,
        in_specs=[
            pl.BlockSpec((tm, in_dims), lambda i: (i, 0)),       # batch tile
            pl.BlockSpec((in_dims, fc1), lambda i: (0, 0)),      # weights stay resident
            pl.BlockSpec((fc1, fc2), lambda i: (0, 0)),
            pl.BlockSpec((fc2, n_pad), lambda i: (0, 0)),
            pl.BlockSpec((1, fc1 + fc2 + n_pad), lambda i: (0, 0)),
        ],
        out_specs=pl.BlockSpec((tm, n_pad), lambda i: (i, 0)),
        compiler_params=pltpu.CompilerParams(
            dimension_semantics=("parallel",)),                  # v7x: shard batch over 2 TCs
        cost_estimate=cost,
    )(state, params["w1"], params["w2"], params["w3"], params["b"])

    return out[:batch, :n_actions]


def init_params(key, input_dims, fc1_dims, fc2_dims, n_actions):
    """PyTorch-style init U(-1/sqrt(fan_in), 1/sqrt(fan_in)); weights stored bf16,
    (in, out) layout, w3/b3 zero-padded so the output is lane-dense (x128)."""
    n_pad = _round_up(n_actions, 128)

    def linear(key, fan_in, fan_out):
        kw, kb = jax.random.split(key)
        bound = 1.0 / jnp.sqrt(fan_in)
        w = jax.random.uniform(kw, (fan_in, fan_out), jnp.float32, -bound, bound)
        b = jax.random.uniform(kb, (1, fan_out), jnp.float32, -bound, bound)
        return w, b

    k1, k2, k3 = jax.random.split(key, 3)
    w1, b1 = linear(k1, input_dims, fc1_dims)
    w2, b2 = linear(k2, fc1_dims, fc2_dims)
    w3, b3 = linear(k3, fc2_dims, n_actions)

    # Pad the action dimension to 128 lanes (zero columns -> identical math).
    w3 = jnp.pad(w3, ((0, 0), (0, n_pad - n_actions)))
    b3 = jnp.pad(b3, ((0, 0), (0, n_pad - n_actions)))

    return {
        "w1": w1.astype(jnp.bfloat16),
        "w2": w2.astype(jnp.bfloat16),
        "w3": w3.astype(jnp.bfloat16),
        "b": jnp.concatenate([b1, b2, b3], axis=1).astype(jnp.float32),
        "n_actions": n_actions,
    }


def reference_forward(state, p):
    """Pure-JAX reference mirroring the kernel math (bf16 MXU operands, f32 accum)."""
    fc1 = p["w1"].shape[1]
    fc2 = p["w2"].shape[1]
    n_pad = p["w3"].shape[1]
    b1 = p["b"][:, :fc1]
    b2 = p["b"][:, fc1:fc1 + fc2]
    b3 = p["b"][:, fc1 + fc2:fc1 + fc2 + n_pad]
    h1 = jnp.maximum(jnp.dot(state.astype(jnp.bfloat16), p["w1"],
                             preferred_element_type=jnp.float32) + b1, 0.0)
    h2 = jnp.maximum(jnp.dot(h1.astype(jnp.bfloat16), p["w2"],
                             preferred_element_type=jnp.float32) + b2, 0.0)
    out = jnp.dot(h2.astype(jnp.bfloat16), p["w3"],
                  preferred_element_type=jnp.float32) + b3
    return out[:, :p["n_actions"]]


if __name__ == "__main__":
    # Small shapes consistent with the module defaults: inputDims=8 observation
    # features, fc1Dims=fc2Dims=256 hidden, nActions=4, batch=8.
    batch, input_dims, fc1_dims, fc2_dims, n_actions = 8, 8, 256, 256, 4

    key = jax.random.PRNGKey(0)
    k_params, k_state = jax.random.split(key)

    params = init_params(k_params, input_dims, fc1_dims, fc2_dims, n_actions)
    state = jax.random.normal(k_state, (batch, input_dims), jnp.float32)

    action_values = dqnetwork_forward(state, params)
    action_values = jax.block_until_ready(action_values)

    expected = reference_forward(state, params)
    assert action_values.shape == (batch, n_actions)
    assert jnp.allclose(action_values, expected, atol=1e-3, rtol=1e-3)

    print("KERNEL_OK")
</pallas_src>

<mosaic_0001>
module attributes {stable_mosaic.version = 11 : i64} {
  func.func @dqn_mlp_kernel(%arg0: i32, %arg1: memref<8x8xf32, #tpu.memory_space<vmem>>, %arg2: memref<8x256xbf16, #tpu.memory_space<vmem>>, %arg3: memref<256x256xbf16, #tpu.memory_space<vmem>>, %arg4: memref<256x128xbf16, #tpu.memory_space<vmem>>, %arg5: memref<1x640xf32, #tpu.memory_space<vmem>>, %arg6: memref<8x128xf32, #tpu.memory_space<vmem>>) attributes {dimension_semantics = [#tpu.dimension_semantics<parallel>], iteration_bounds = array<i64: 1>, scalar_prefetch = 0 : i64, scratch_operands = 0 : i64, tpu.core_type = #tpu.core_type<tc>, window_params = [{transform_indices = @transform_0, window_bounds = array<i64: 8, 8>}, {pipeline_mode = #tpu.pipeline_mode<synchronous>, transform_indices = @transform_1, window_bounds = array<i64: 8, 256>}, {pipeline_mode = #tpu.pipeline_mode<synchronous>, transform_indices = @transform_2, window_bounds = array<i64: 256, 256>}, {pipeline_mode = #tpu.pipeline_mode<synchronous>, transform_indices = @transform_3, window_bounds = array<i64: 256, 128>}, {pipeline_mode = #tpu.pipeline_mode<synchronous>, transform_indices = @transform_4, window_bounds = array<i64: 1, 640>}, {transform_indices = @transform_5, window_bounds = array<i64: 8, 128>}]} {
    %c0 = arith.constant 0 : index
    %c0_0 = arith.constant 0 : index
    %0 = vector.load %arg1[%c0, %c0_0] : memref<8x8xf32, #tpu.memory_space<vmem>>, vector<8x8xf32>
    %c0_1 = arith.constant 0 : index
    %c0_2 = arith.constant 0 : index
    %1 = vector.load %arg5[%c0_1, %c0_2] : memref<1x640xf32, #tpu.memory_space<vmem>>, vector<1x256xf32>
    %c0_3 = arith.constant 0 : index
    %c256 = arith.constant 256 : index
    %2 = vector.load %arg5[%c0_3, %c256] : memref<1x640xf32, #tpu.memory_space<vmem>>, vector<1x256xf32>
    %c0_4 = arith.constant 0 : index
    %c512 = arith.constant 512 : index
    %3 = vector.load %arg5[%c0_4, %c512] : memref<1x640xf32, #tpu.memory_space<vmem>>, vector<1x128xf32>
    %4 = arith.truncf %0 : vector<8x8xf32> to vector<8x8xbf16>
    %c0_5 = arith.constant 0 : index
    %c0_6 = arith.constant 0 : index
    %5 = vector.load %arg2[%c0_5, %c0_6] : memref<8x256xbf16, #tpu.memory_space<vmem>>, vector<8x256xbf16>
    %cst = arith.constant dense<0.000000e+00> : vector<8x256xf32>
    %6 = tpu.matmul %4, %5, %cst {dimension_numbers = #tpu.dot_dimension_numbers<[1], [0], [0], [1], [0, 0, 1, 1], [], []>} : vector<8x8xbf16>, vector<8x256xbf16>, vector<8x256xf32> -> vector<8x256xf32>
    %7 = vector.broadcast %1 : vector<1x256xf32> to vector<8x256xf32>
    %8 = arith.addf %6, %7 : vector<8x256xf32>
    %cst_7 = arith.constant 0.000000e+00 : f32
    %9 = vector.broadcast %cst_7 : f32 to vector<8x256xf32>
    %10 = arith.maximumf %8, %9 : vector<8x256xf32>
    %11 = arith.truncf %10 : vector<8x256xf32> to vector<8x256xbf16>
    %c0_8 = arith.constant 0 : index
    %c0_9 = arith.constant 0 : index
    %12 = vector.load %arg3[%c0_8, %c0_9] : memref<256x256xbf16, #tpu.memory_space<vmem>>, vector<256x256xbf16>
    %cst_10 = arith.constant dense<0.000000e+00> : vector<8x256xf32>
    %13 = tpu.matmul %11, %12, %cst_10 {dimension_numbers = #tpu.dot_dimension_numbers<[1], [0], [0], [1], [0, 0, 1, 1], [], []>} : vector<8x256xbf16>, vector<256x256xbf16>, vector<8x256xf32> -> vector<8x256xf32>
    %14 = vector.broadcast %2 : vector<1x256xf32> to vector<8x256xf32>
    %15 = arith.addf %13, %14 : vector<8x256xf32>
    %cst_11 = arith.constant 0.000000e+00 : f32
    %16 = vector.broadcast %cst_11 : f32 to vector<8x256xf32>
    %17 = arith.maximumf %15, %16 : vector<8x256xf32>
    %18 = arith.truncf %17 : vector<8x256xf32> to vector<8x256xbf16>
    %c0_12 = arith.constant 0 : index
    %c0_13 = arith.constant 0 : index
    %19 = vector.load %arg4[%c0_12, %c0_13] : memref<256x128xbf16, #tpu.memory_space<vmem>>, vector<256x128xbf16>
    %cst_14 = arith.constant dense<0.000000e+00> : vector<8x128xf32>
    %20 = tpu.matmul %18, %19, %cst_14 {dimension_numbers = #tpu.dot_dimension_numbers<[1], [0], [0], [1], [0, 0, 1, 1], [], []>} : vector<8x256xbf16>, vector<256x128xbf16>, vector<8x128xf32> -> vector<8x128xf32>
    %21 = vector.broadcast %3 : vector<1x128xf32> to vector<8x128xf32>
    %22 = arith.addf %20, %21 : vector<8x128xf32>
    %c0_15 = arith.constant 0 : index
    %c0_16 = arith.constant 0 : index
    %23 = vector.load %arg6[%c0_15, %c0_16] : memref<8x128xf32, #tpu.memory_space<vmem>>, vector<8x128xf32>
    tpu.vector_store %arg6[%c0_15, %c0_16], %22 {strides = array<i32>} : memref<8x128xf32, #tpu.memory_space<vmem>>, vector<8x128xf32>,
    return
  }
  func.func @transform_0(%arg0: i32) -> (i32, i32) {
    %c0_i32 = arith.constant 0 : i32
    %c0_i32_0 = arith.constant 0 : i32
    return %arg0, %c0_i32 : i32, i32
  }
  func.func @transform_1(%arg0: i32) -> (i32, i32) {
    %c0_i32 = arith.constant 0 : i32
    %c0_i32_0 = arith.constant 0 : i32
    %c0_i32_1 = arith.constant 0 : i32
    return %c0_i32, %c0_i32_0 : i32, i32
  }
  func.func @transform_2(%arg0: i32) -> (i32, i32) {
    %c0_i32 = arith.constant 0 : i32
    %c0_i32_0 = arith.constant 0 : i32
    %c0_i32_1 = arith.constant 0 : i32
    return %c0_i32, %c0_i32_0 : i32, i32
  }
  func.func @transform_3(%arg0: i32) -> (i32, i32) {
    %c0_i32 = arith.constant 0 : i32
    %c0_i32_0 = arith.constant 0 : i32
    %c0_i32_1 = arith.constant 0 : i32
    return %c0_i32, %c0_i32_0 : i32, i32
  }
  func.func @transform_4(%arg0: i32) -> (i32, i32) {
    %c0_i32 = arith.constant 0 : i32
    %c0_i32_0 = arith.constant 0 : i32
    %c0_i32_1 = arith.constant 0 : i32
    return %c0_i32, %c0_i32_0 : i32, i32
  }
  func.func @transform_5(%arg0: i32) -> (i32, i32) {
    %c0_i32 = arith.constant 0 : i32
    %c0_i32_0 = arith.constant 0 : i32
    return %arg0, %c0_i32 : i32, i32
  }
}

</mosaic_0001>

<llo_original>
// kernel: tpu_custom_call.1
$region0: #{tpu_custom_call.1}
  #allocation0 [shape = 'u32[]', space=smem, size = 0x4, offset = 0x4, fixed_abs, tag = 'smem constant byte address 0x4 - core index']
  #allocation1 [shape = 'u32[144,128]{1,0:T(1,128)}', space=vmem, size = 0x12000, scoped, tag = 'internal scratch']
  %s0 = inlined_call_operand.hbm [shape: f32[8,8], index: 0, kind: input, shape index: {}]
  %s1 = inlined_call_operand.hbm [shape: bf16[8,256], index: 1, kind: input, shape index: {}]
  %s2 = inlined_call_operand.hbm [shape: bf16[256,256], index: 2, kind: input, shape index: {}]
  %s3 = inlined_call_operand.hbm [shape: bf16[256,128], index: 3, kind: input, shape index: {}]
  %s4 = inlined_call_operand.vmem [shape: f32[1,640], index: 4, kind: input, shape index: {}]
  %s5 = inlined_call_operand.hbm [shape: f32[8,128], index: 5, kind: output, shape index: {}]
  %s6 = sld [smem:[#allocation0]]
  $region46: #{tpu_custom_call.1} parent=0
    _
  %s8 = ssub.s32 1, %s6
  %s9 = scalar_select 0, %s8, %s6
  $region1: #{tpu_custom_call.1} parent=0
    #allocation2 [shape = 'u8[4096]{0}', space=vmem, size = 0x1000, scoped, tag = 'input window, operand 0, single buffered']
    #allocation3 [shape = 's32[1]{0}', space=sflag, size = 0x4, scoped, tag = 'scoped memory for tpu_custom_call.1']
    #allocation4 [shape = 's32[1]{0}', space=sflag, size = 0x4, scoped, tag = 'scoped memory for tpu_custom_call.1']
    #allocation5 [shape = 'u8[4096]{0}', space=vmem, size = 0x1000, scoped, tag = 'input window, operand 1, single buffered']
    #allocation6 [shape = 's32[1]{0}', space=sflag, size = 0x4, scoped, tag = 'scoped memory for tpu_custom_call.1']
    #allocation7 [shape = 'u8[131072]{0}', space=vmem, size = 0x20000, scoped, tag = 'input window, operand 2, single buffered']
    #allocation8 [shape = 'u8[65536]{0}', space=vmem, size = 0x10000, scoped, tag = 'input window, operand 3, single buffered']
    #allocation9 [shape = 's32[1]{0}', space=sflag, size = 0x4, scoped, tag = 'scoped memory for tpu_custom_call.1']
    #allocation10 [shape = 'u8[4096]{0}', space=vmem, size = 0x1000, scoped, tag = 'output window, operand 0, single buffered']
    %10 = vsyncpa [#allocation3], 0
    %11 = vsyncpa [#allocation6], 0
    %12 = vsyncpa [#allocation9], 0
    %13 = vsyncpa [#allocation4], 0
    // Predicated region
    $region2: #{tpu_custom_call.1} parent=1 // pred_check
      _
    $region3: #{tpu_custom_call.1} parent=1 // pred_check_branch
      %15 = sbr.rel (0) target = $region5
    $region4: #{tpu_custom_call.1} parent=1 // pred_region
      %s17 = ssub.s32 128, 128
      %18 = vsyncadd [#allocation3], %s17
      %s20 = sshll.u32 [#allocation2], 4
      %s21 = int_to_ptr.vmem [resolvable:$true] %s20
      %23 = dma.hbm_to_vmem [thread:$0]  %s0, 128, %s21, [#allocation3]
    $region5: #{tpu_custom_call.1} parent=1 // pred_fallthru
      _
    // Predicated region
    $region6: #{tpu_custom_call.1} parent=1 // pred_check
      _
    $region7: #{tpu_custom_call.1} parent=1 // pred_check_branch
      %25 = sbr.rel (0) target = $region9
    $region8: #{tpu_custom_call.1} parent=1 // pred_region
      %s27 = ssub.s32 128, 128
      %28 = vsyncadd [#allocation6], %s27
      %s30 = sshll.u32 [#allocation5], 4
      %s31 = int_to_ptr.vmem [resolvable:$true] %s30
      %33 = dma.hbm_to_vmem [thread:$0]  %s1, 128, %s31, [#allocation6]
    $region9: #{tpu_custom_call.1} parent=1 // pred_fallthru
      _
    // Predicated region
    $region10: #{tpu_custom_call.1} parent=1 // pred_check
      _
    $region11: #{tpu_custom_call.1} parent=1 // pred_check_branch
      %35 = sbr.rel (0) target = $region13
    $region12: #{tpu_custom_call.1} parent=1 // pred_region
      %s37 = ssub.s32 4096, 4096
      %38 = vsyncadd [#allocation6], %s37
      %s39 = sshll.u32 [#allocation7], 4
      %s40 = int_to_ptr.vmem [resolvable:$true] %s39
      %45 = dma.hbm_to_vmem [thread:$0]  %s2, 4096, %s40, [#allocation6], 128, 128, 8
    $region13: #{tpu_custom_call.1} parent=1 // pred_fallthru
      _
    // Predicated region
    $region14: #{tpu_custom_call.1} parent=1 // pred_check
      _
    $region15: #{tpu_custom_call.1} parent=1 // pred_check_branch
      %47 = sbr.rel (0) target = $region17
    $region16: #{tpu_custom_call.1} parent=1 // pred_region
      %s49 = ssub.s32 2048, 2048
      %50 = vsyncadd [#allocation9], %s49
      %s51 = sshll.u32 [#allocation8], 4
      %s52 = int_to_ptr.vmem [resolvable:$true] %s51
      %57 = dma.hbm_to_vmem [thread:$0]  %s3, 2048, %s52, [#allocation9], 64, 64, 4
    $region17: #{tpu_custom_call.1} parent=1 // pred_fallthru
      _
    // Predicated region
    $region18: #{tpu_custom_call.1} parent=1 // pred_check
      _
    $region19: #{tpu_custom_call.1} parent=1 // pred_check_branch
      %59 = sbr.rel (0) target = $region21
    $region20: #{tpu_custom_call.1} parent=1 // pred_region
      _
    $region21: #{tpu_custom_call.1} parent=1 // pred_fallthru
      _
    // Predicated region
    $region22: #{tpu_custom_call.1} parent=1 // pred_check
      _
    $region23: #{tpu_custom_call.1} parent=1 // pred_check_branch
      %61 = sbr.rel (0) target = $region25
    $region24: #{tpu_custom_call.1} parent=1 // pred_region
      %62 = dma.done [#allocation3], 128
    $region25: #{tpu_custom_call.1} parent=1 // pred_fallthru
      _
    // Predicated region
    $region26: #{tpu_custom_call.1} parent=1 // pred_check
      _
    $region27: #{tpu_custom_call.1} parent=1 // pred_check_branch
      %64 = sbr.rel (0) target = $region29
    $region28: #{tpu_custom_call.1} parent=1 // pred_region
      %65 = dma.done [#allocation6], 128
    $region29: #{tpu_custom_call.1} parent=1 // pred_fallthru
      _
    // Predicated region
    $region30: #{tpu_custom_call.1} parent=1 // pred_check
      _
    $region31: #{tpu_custom_call.1} parent=1 // pred_check_branch
      %67 = sbr.rel (0) target = $region33
    $region32: #{tpu_custom_call.1} parent=1 // pred_region
      %68 = dma.done [#allocation6], 4096
    $region33: #{tpu_custom_call.1} parent=1 // pred_fallthru
      _
    // Predicated region
    $region34: #{tpu_custom_call.1} parent=1 // pred_check
      _
    $region35: #{tpu_custom_call.1} parent=1 // pred_check_branch
      %70 = sbr.rel (0) target = $region37
    $region36: #{tpu_custom_call.1} parent=1 // pred_region
      %71 = dma.done [#allocation9], 2048
    $region37: #{tpu_custom_call.1} parent=1 // pred_fallthru
      _
    %v73 = vld [vmem:[#allocation2] sm:$0xff]
    %v74 = vld [vmem:[%s4] sm:$0x3]
    %v75 = vld [vmem:[%s4 + $0x2] sm:$0x3]
    %v76 = vld [vmem:[%s4 + $0x4] sm:$0x1]
    %v77 = vpack.c.bf16 %v73, %v73
    %v78 = vld [vmem:[#allocation5] sm:$0xff]
    %v80 = vlaneseq
    %v81 = vshrl.u32 %v80, 7
    %v82 = vsub.s32 0, %v81
    %v83 = vrot.slane %v74, %v82
    %v84 = vlaneseq
    %v85 = vshrl.u32 %v84, 7
    %v86 = vsub.s32 1, %v85
    %v87 = vrot.slane %v74, %v86
    %v91 = vunpack.c.l.b16 %v78
    %v92 = vunpack.c.h.b16 %v78
    %v93 = vpack.c.b16 %v91, %v91
    %v94 = vpack.c.b16 %v92, %v92
    %vm95 = vcmask 64512
    %v97 = vsel %vm95, %v77, 0
    %vm99 = vcmask 1043456
    %v101 = vsel %vm99, %v93, 0
    %v104 = vsel %vm99, %v94, 0
    %106 = vmatprep.subr.bf16.mxu0 %v104
    %107 = vmatpush1.bf16.msra.mxu0 %v101
    %108 = vmatprep.subr.bf16.mxu0 0
    %109 = vmatpush1.bf16.msra.mxu0 0
    %110 = vmatprep.subr.bf16.mxu0 0
    %111 = vmatpush1.bf16.msra.mxu0 0
    %112 = vmatprep.subr.bf16.mxu0 0
    %113 = vmatpush1.bf16.msra.mxu0 0
    %114 = vmatprep.subr.bf16.mxu0 0
    %115 = vmatpush1.bf16.msra.mxu0 0
    %116 = vmatprep.subr.bf16.mxu0 0
    %117 = vmatpush1.bf16.msra.mxu0 0
    %118 = vmatprep.subr.bf16.mxu0 0
    %119 = vmatpush1.bf16.msra.mxu0 0
    %120 = vmatprep.subr.bf16.mxu0 0
    %121 = vmatpush1.bf16.msra.mxu0 0
    %122 = vmatprep.subr.bf16.mxu0 0
    %123 = vmatpush1.bf16.msra.mxu0 0
    %124 = vmatprep.subr.bf16.mxu0 0
    %125 = vmatpush1.bf16.msra.mxu0 0
    %126 = vmatprep.subr.bf16.mxu0 0
    %127 = vmatpush1.bf16.msra.mxu0 0
    %128 = vmatprep.subr.bf16.mxu0 0
    %129 = vmatpush1.bf16.msra.mxu0 0
    %130 = vmatprep.subr.bf16.mxu0 0
    %131 = vmatpush1.bf16.msra.mxu0 0
    %132 = vmatprep.subr.bf16.mxu0 0
    %133 = vmatpush1.bf16.msra.mxu0 0
    %134 = vmatprep.subr.bf16.mxu0 0
    %135 = vmatpush1.bf16.msra.mxu0 0
    %136 = vmatprep.subr.bf16.mxu0 0
    %137 = vmatpush1.bf16.msra.mxu0 0
    %138 = vmatprep.mubr.bf16.mxu0 0
    %139 = vmatmul.mubr.bf16.gmra.mrb[0].mxu0 %v97
    %v140 = vpop.f32.mrb[0].mxu0
    %v141 = vadd.f32 %v83, %v140
    %v142 = vpop.f32.mrb[0].mxu0
    %v143 = vadd.f32 %v87, %v142
    %v144 = vpop.f32.mrb[0].mxu0
    %v145 = vpop.f32.mrb[0].mxu0
    %146 = vdwg.mxu0
    %v147 = vmax.f32 %v141, 0.0
    %v148 = vmax.f32 %v143, 0.0
    %v149 = vpack.c.bf16 %v147, %v147
    %v150 = vpack.c.bf16 %v148, %v148
    %v151 = vld [vmem:[#allocation7] sm:$0xff]
    %v152 = vld [vmem:[#allocation7 + $0x8] sm:$0xff]
    %v153 = vld [vmem:[#allocation7 + $0x10] sm:$0xff]
    %v154 = vld [vmem:[#allocation7 + $0x18] sm:$0xff]
    %v155 = vld [vmem:[#allocation7 + $0x20] sm:$0xff]
    %v156 = vld [vmem:[#allocation7 + $0x28] sm:$0xff]
    %v157 = vld [vmem:[#allocation7 + $0x30] sm:$0xff]
    %v158 = vld [vmem:[#allocation7 + $0x38] sm:$0xff]
    %v159 = vld [vmem:[#allocation7 + $0x40] sm:$0xff]
    %v160 = vld [vmem:[#allocation7 + $0x48] sm:$0xff]
    %v161 = vld [vmem:[#allocation7 + $0x50] sm:$0xff]
    %v162 = vld [vmem:[#allocation7 + $0x58] sm:$0xff]
    %v163 = vld [vmem:[#allocation7 + $0x60] sm:$0xff]
    %v164 = vld [vmem:[#allocation7 + $0x68] sm:$0xff]
    %v165 = vld [vmem:[#allocation7 + $0x70] sm:$0xff]
    %v166 = vld [vmem:[#allocation7 + $0x78] sm:$0xff]
    %v167 = vld [vmem:[#allocation7 + $0x80] sm:$0xff]
    %v168 = vld [vmem:[#allocation7 + $0x88] sm:$0xff]
    %v169 = vld [vmem:[#allocation7 + $0x90] sm:$0xff]
    %v170 = vld [vmem:[#allocation7 + $0x98] sm:$0xff]
    %v171 = vld [vmem:[#allocation7 + $0xa0] sm:$0xff]
    %v172 = vld [vmem:[#allocation7 + $0xa8] sm:$0xff]
    %v173 = vld [vmem:[#allocation7 + $0xb0] sm:$0xff]
    %v174 = vld [vmem:[#allocation7 + $0xb8] sm:$0xff]
    %v175 = vld [vmem:[#allocation7 + $0xc0] sm:$0xff]
    %v176 = vld [vmem:[#allocation7 + $0xc8] sm:$0xff]
    %v177 = vld [vmem:[#allocation7 + $0xd0] sm:$0xff]
    %v178 = vld [vmem:[#allocation7 + $0xd8] sm:$0xff]
    %v179 = vld [vmem:[#allocation7 + $0xe0] sm:$0xff]
    %v180 = vld [vmem:[#allocation7 + $0xe8] sm:$0xff]
    %v181 = vld [vmem:[#allocation7 + $0xf0] sm:$0xff]
    %v182 = vld [vmem:[#allocation7 + $0xf8] sm:$0xff]
    %v184 = vlaneseq
    %v185 = vshrl.u32 %v184, 7
    %v186 = vsub.s32 0, %v185
    %v187 = vrot.slane %v75, %v186
    %v188 = vlaneseq
    %v189 = vshrl.u32 %v188, 7
    %v190 = vsub.s32 1, %v189
    %v191 = vrot.slane %v75, %v190
    %v226 = vunpack.c.l.b16 %v151
    %v227 = vunpack.c.h.b16 %v151
    %v228 = vunpack.c.l.b16 %v152
    %v229 = vunpack.c.h.b16 %v152
    %v230 = vunpack.c.l.b16 %v153
    %v231 = vunpack.c.h.b16 %v153
    %v232 = vunpack.c.l.b16 %v154
    %v233 = vunpack.c.h.b16 %v154
    %v234 = vunpack.c.l.b16 %v155
    %v235 = vunpack.c.h.b16 %v155
    %v236 = vunpack.c.l.b16 %v156
    %v237 = vunpack.c.h.b16 %v156
    %v238 = vunpack.c.l.b16 %v157
    %v239 = vunpack.c.h.b16 %v157
    %v240 = vunpack.c.l.b16 %v158
    %v241 = vunpack.c.h.b16 %v158
    %v242 = vunpack.c.l.b16 %v159
    %v243 = vunpack.c.h.b16 %v159
    %v244 = vunpack.c.l.b16 %v160
    %v245 = vunpack.c.h.b16 %v160
    %v246 = vunpack.c.l.b16 %v161
    %v247 = vunpack.c.h.b16 %v161
    %v248 = vunpack.c.l.b16 %v162
    %v249 = vunpack.c.h.b16 %v162
    %v250 = vunpack.c.l.b16 %v163
    %v251 = vunpack.c.h.b16 %v163
    %v252 = vunpack.c.l.b16 %v164
    %v253 = vunpack.c.h.b16 %v164
    %v254 = vunpack.c.l.b16 %v165
    %v255 = vunpack.c.h.b16 %v165
    %v256 = vunpack.c.l.b16 %v166
    %v257 = vunpack.c.h.b16 %v166
    %v258 = vunpack.c.l.b16 %v167
    %v259 = vunpack.c.h.b16 %v167
    %v260 = vunpack.c.l.b16 %v168
    %v261 = vunpack.c.h.b16 %v168
    %v262 = vunpack.c.l.b16 %v169
    %v263 = vunpack.c.h.b16 %v169
    %v264 = vunpack.c.l.b16 %v170
    %v265 = vunpack.c.h.b16 %v170
    %v266 = vunpack.c.l.b16 %v171
    %v267 = vunpack.c.h.b16 %v171
    %v268 = vunpack.c.l.b16 %v172
    %v269 = vunpack.c.h.b16 %v172
    %v270 = vunpack.c.l.b16 %v173
    %v271 = vunpack.c.h.b16 %v173
    %v272 = vunpack.c.l.b16 %v174
    %v273 = vunpack.c.h.b16 %v174
    %v274 = vunpack.c.l.b16 %v175
    %v275 = vunpack.c.h.b16 %v175
    %v276 = vunpack.c.l.b16 %v176
    %v277 = vunpack.c.h.b16 %v176
    %v278 = vunpack.c.l.b16 %v177
    %v279 = vunpack.c.h.b16 %v177
    %v280 = vunpack.c.l.b16 %v178
    %v281 = vunpack.c.h.b16 %v178
    %v282 = vunpack.c.l.b16 %v179
    %v283 = vunpack.c.h.b16 %v179
    %v284 = vunpack.c.l.b16 %v180
    %v285 = vunpack.c.h.b16 %v180
    %v286 = vunpack.c.l.b16 %v181
    %v287 = vunpack.c.h.b16 %v181
    %v288 = vunpack.c.l.b16 %v182
    %v289 = vunpack.c.h.b16 %v182
    %v290 = vpack.c.b16 %v228, %v226
    %v291 = vpack.c.b16 %v229, %v227
    %v292 = vpack.c.b16 %v232, %v230
    %v293 = vpack.c.b16 %v233, %v231
    %v294 = vpack.c.b16 %v236, %v234
    %v295 = vpack.c.b16 %v237, %v235
    %v296 = vpack.c.b16 %v240, %v238
    %v297 = vpack.c.b16 %v241, %v239
    %v298 = vpack.c.b16 %v244, %v242
    %v299 = vpack.c.b16 %v245, %v243
    %v300 = vpack.c.b16 %v248, %v246
    %v301 = vpack.c.b16 %v249, %v247
    %v302 = vpack.c.b16 %v252, %v250
    %v303 = vpack.c.b16 %v253, %v251
    %v304 = vpack.c.b16 %v256, %v254
    %v305 = vpack.c.b16 %v257, %v255
    %v306 = vpack.c.b16 %v260, %v258
    %v307 = vpack.c.b16 %v261, %v259
    %v308 = vpack.c.b16 %v264, %v262
    %v309 = vpack.c.b16 %v265, %v263
    %v310 = vpack.c.b16 %v268, %v266
    %v311 = vpack.c.b16 %v269, %v267
    %v312 = vpack.c.b16 %v272, %v270
    %v313 = vpack.c.b16 %v273, %v271
    %v314 = vpack.c.b16 %v276, %v274
    %v315 = vpack.c.b16 %v277, %v275
    %v316 = vpack.c.b16 %v280, %v278
    %v317 = vpack.c.b16 %v281, %v279
    %v318 = vpack.c.b16 %v284, %v282
    %v319 = vpack.c.b16 %v285, %v283
    %v320 = vpack.c.b16 %v288, %v286
    %v321 = vpack.c.b16 %v289, %v287
    %354 = vmatprep.subr.bf16.mxu0 %v291
    %355 = vmatpush1.bf16.msra.mxu0 %v290
    %356 = vmatprep.subr.bf16.mxu0 %v293
    %357 = vmatpush1.bf16.msra.mxu0 %v292
    %358 = vmatprep.subr.bf16.mxu0 %v295
    %359 = vmatpush1.bf16.msra.mxu0 %v294
    %360 = vmatprep.subr.bf16.mxu0 %v297
    %361 = vmatpush1.bf16.msra.mxu0 %v296
    %362 = vmatprep.subr.bf16.mxu0 %v299
    %363 = vmatpush1.bf16.msra.mxu0 %v298
    %364 = vmatprep.subr.bf16.mxu0 %v301
    %365 = vmatpush1.bf16.msra.mxu0 %v300
    %366 = vmatprep.subr.bf16.mxu0 %v303
    %367 = vmatpush1.bf16.msra.mxu0 %v302
    %368 = vmatprep.subr.bf16.mxu0 %v305
    %369 = vmatpush1.bf16.msra.mxu0 %v304
    %370 = vmatprep.subr.bf16.mxu0 %v307
    %371 = vmatpush1.bf16.msra.mxu0 %v306
    %372 = vmatprep.subr.bf16.mxu0 %v309
    %373 = vmatpush1.bf16.msra.mxu0 %v308
    %374 = vmatprep.subr.bf16.mxu0 %v311
    %375 = vmatpush1.bf16.msra.mxu0 %v310
    %376 = vmatprep.subr.bf16.mxu0 %v313
    %377 = vmatpush1.bf16.msra.mxu0 %v312
    %378 = vmatprep.subr.bf16.mxu0 %v315
    %379 = vmatpush1.bf16.msra.mxu0 %v314
    %380 = vmatprep.subr.bf16.mxu0 %v317
    %381 = vmatpush1.bf16.msra.mxu0 %v316
    %382 = vmatprep.subr.bf16.mxu0 %v319
    %383 = vmatpush1.bf16.msra.mxu0 %v318
    %384 = vmatprep.subr.bf16.mxu0 %v321
    %385 = vmatpush1.bf16.msra.mxu0 %v320
    %386 = vmatprep.mubr.bf16.mxu0 %v150
    %387 = vmatmul.mubr.bf16.gmra.mrb[0].mxu0 %v149
    %v388 = vpop.f32.mrb[0].mxu0
    %v389 = vadd.f32 %v187, %v388
    %v390 = vpop.f32.mrb[0].mxu0
    %v391 = vadd.f32 %v191, %v390
    %v392 = vpop.f32.mrb[0].mxu0
    %v393 = vpop.f32.mrb[0].mxu0
    %394 = vdwg.mxu0
    %v395 = vmax.f32 %v389, 0.0
    %v396 = vmax.f32 %v391, 0.0
    %v397 = vpack.c.bf16 %v395, %v395
    %v398 = vpack.c.bf16 %v396, %v396
    %v399 = vld [vmem:[#allocation8] sm:$0xf]
    %v400 = vld [vmem:[#allocation8 + $0x4] sm:$0xf]
    %v401 = vld [vmem:[#allocation8 + $0x8] sm:$0xf]
    %v402 = vld [vmem:[#allocation8 + $0xc] sm:$0xf]
    %v403 = vld [vmem:[#allocation8 + $0x10] sm:$0xf]
    %v404 = vld [vmem:[#allocation8 + $0x14] sm:$0xf]
    %v405 = vld [vmem:[#allocation8 + $0x18] sm:$0xf]
    %v406 = vld [vmem:[#allocation8 + $0x1c] sm:$0xf]
    %v407 = vld [vmem:[#allocation8 + $0x20] sm:$0xf]
    %v408 = vld [vmem:[#allocation8 + $0x24] sm:$0xf]
    %v409 = vld [vmem:[#allocation8 + $0x28] sm:$0xf]
    %v410 = vld [vmem:[#allocation8 + $0x2c] sm:$0xf]
    %v411 = vld [vmem:[#allocation8 + $0x30] sm:$0xf]
    %v412 = vld [vmem:[#allocation8 + $0x34] sm:$0xf]
    %v413 = vld [vmem:[#allocation8 + $0x38] sm:$0xf]
    %v414 = vld [vmem:[#allocation8 + $0x3c] sm:$0xf]
    %v415 = vld [vmem:[#allocation8 + $0x40] sm:$0xf]
    %v416 = vld [vmem:[#allocation8 + $0x44] sm:$0xf]
    %v417 = vld [vmem:[#allocation8 + $0x48] sm:$0xf]
    %v418 = vld [vmem:[#allocation8 + $0x4c] sm:$0xf]
    %v419 = vld [vmem:[#allocation8 + $0x50] sm:$0xf]
    %v420 = vld [vmem:[#allocation8 + $0x54] sm:$0xf]
    %v421 = vld [vmem:[#allocation8 + $0x58] sm:$0xf]
    %v422 = vld [vmem:[#allocation8 + $0x5c] sm:$0xf]
    %v423 = vld [vmem:[#allocation8 + $0x60] sm:$0xf]
    %v424 = vld [vmem:[#allocation8 + $0x64] sm:$0xf]
    %v425 = vld [vmem:[#allocation8 + $0x68] sm:$0xf]
    %v426 = vld [vmem:[#allocation8 + $0x6c] sm:$0xf]
    %v427 = vld [vmem:[#allocation8 + $0x70] sm:$0xf]
    %v428 = vld [vmem:[#allocation8 + $0x74] sm:$0xf]
    %v429 = vld [vmem:[#allocation8 + $0x78] sm:$0xf]
    %v430 = vld [vmem:[#allocation8 + $0x7c] sm:$0xf]
    %v432 = vlaneseq
    %v433 = vshrl.u32 %v432, 7
    %v434 = vsub.s32 0, %v433
    %v435 = vrot.slane %v76, %v434
    %v469 = vunpack.c.l.b16 %v399
    %v470 = vunpack.c.l.b16 %v400
    %v471 = vunpack.c.l.b16 %v401
    %v472 = vunpack.c.l.b16 %v402
    %v473 = vunpack.c.l.b16 %v403
    %v474 = vunpack.c.l.b16 %v404
    %v475 = vunpack.c.l.b16 %v405
    %v476 = vunpack.c.l.b16 %v406
    %v477 = vunpack.c.l.b16 %v407
    %v478 = vunpack.c.l.b16 %v408
    %v479 = vunpack.c.l.b16 %v409
    %v480 = vunpack.c.l.b16 %v410
    %v481 = vunpack.c.l.b16 %v411
    %v482 = vunpack.c.l.b16 %v412
    %v483 = vunpack.c.l.b16 %v413
    %v484 = vunpack.c.l.b16 %v414
    %v485 = vunpack.c.l.b16 %v415
    %v486 = vunpack.c.l.b16 %v416
    %v487 = vunpack.c.l.b16 %v417
    %v488 = vunpack.c.l.b16 %v418
    %v489 = vunpack.c.l.b16 %v419
    %v490 = vunpack.c.l.b16 %v420
    %v491 = vunpack.c.l.b16 %v421
    %v492 = vunpack.c.l.b16 %v422
    %v493 = vunpack.c.l.b16 %v423
    %v494 = vunpack.c.l.b16 %v424
    %v495 = vunpack.c.l.b16 %v425
    %v496 = vunpack.c.l.b16 %v426
    %v497 = vunpack.c.l.b16 %v427
    %v498 = vunpack.c.l.b16 %v428
    %v499 = vunpack.c.l.b16 %v429
    %v500 = vunpack.c.l.b16 %v430
    %v501 = vpack.c.b16 %v470, %v469
    %v502 = vpack.c.b16 %v472, %v471
    %v503 = vpack.c.b16 %v474, %v473
    %v504 = vpack.c.b16 %v476, %v475
    %v505 = vpack.c.b16 %v478, %v477
    %v506 = vpack.c.b16 %v480, %v479
    %v507 = vpack.c.b16 %v482, %v481
    %v508 = vpack.c.b16 %v484, %v483
    %v509 = vpack.c.b16 %v486, %v485
    %v510 = vpack.c.b16 %v488, %v487
    %v511 = vpack.c.b16 %v490, %v489
    %v512 = vpack.c.b16 %v492, %v491
    %v513 = vpack.c.b16 %v494, %v493
    %v514 = vpack.c.b16 %v496, %v495
    %v515 = vpack.c.b16 %v498, %v497
    %v516 = vpack.c.b16 %v500, %v499
    %533 = vmatprep.subr.bf16.mxu0 0
    %534 = vmatpush1.bf16.msra.mxu0 %v501
    %535 = vmatprep.subr.bf16.mxu0 0
    %536 = vmatpush1.bf16.msra.mxu0 %v502
    %537 = vmatprep.subr.bf16.mxu0 0
    %538 = vmatpush1.bf16.msra.mxu0 %v503
    %539 = vmatprep.subr.bf16.mxu0 0
    %540 = vmatpush1.bf16.msra.mxu0 %v504
    %541 = vmatprep.subr.bf16.mxu0 0
    %542 = vmatpush1.bf16.msra.mxu0 %v505
    %543 = vmatprep.subr.bf16.mxu0 0
    %544 = vmatpush1.bf16.msra.mxu0 %v506
    %545 = vmatprep.subr.bf16.mxu0 0
    %546 = vmatpush1.bf16.msra.mxu0 %v507
    %547 = vmatprep.subr.bf16.mxu0 0
    %548 = vmatpush1.bf16.msra.mxu0 %v508
    %549 = vmatprep.subr.bf16.mxu0 0
    %550 = vmatpush1.bf16.msra.mxu0 %v509
    %551 = vmatprep.subr.bf16.mxu0 0
    %552 = vmatpush1.bf16.msra.mxu0 %v510
    %553 = vmatprep.subr.bf16.mxu0 0
    %554 = vmatpush1.bf16.msra.mxu0 %v511
    %555 = vmatprep.subr.bf16.mxu0 0
    %556 = vmatpush1.bf16.msra.mxu0 %v512
    %557 = vmatprep.subr.bf16.mxu0 0
    %558 = vmatpush1.bf16.msra.mxu0 %v513
    %559 = vmatprep.subr.bf16.mxu0 0
    %560 = vmatpush1.bf16.msra.mxu0 %v514
    %561 = vmatprep.subr.bf16.mxu0 0
    %562 = vmatpush1.bf16.msra.mxu0 %v515
    %563 = vmatprep.subr.bf16.mxu0 0
    %564 = vmatpush1.bf16.msra.mxu0 %v516
    %565 = vmatprep.mubr.bf16.mxu0 %v398
    %566 = vmatmul.mubr.bf16.gmra.mrb[0].mxu0 %v397
    %v567 = vpop.f32.mrb[0].mxu0
    %v568 = vadd.f32 %v435, %v567
    %v569 = vpop.f32.mrb[0].mxu0
    %v570 = vpop.f32.mrb[0].mxu0
    %v571 = vpop.f32.mrb[0].mxu0
    %572 = vdwg.mxu0
    %573 = vst [vmem:[#allocation10] sm:$0xff] %v568
    // Predicated region
    $region38: #{tpu_custom_call.1} parent=1 // pred_check
      _
    $region39: #{tpu_custom_call.1} parent=1 // pred_check_branch
      %575 = sbr.rel (0) target = $region41
    $region40: #{tpu_custom_call.1} parent=1 // pred_region
      %s577 = ssub.s32 128, 128
      %578 = vsyncadd [#allocation4], %s577
      %s580 = sshll.u32 [#allocation10], 4
      %s581 = int_to_ptr.vmem [resolvable:$true] %s580
      %583 = dma.vmem_to_hbm [thread:$0]  %s581, 128, %s5, [#allocation4]
    $region41: #{tpu_custom_call.1} parent=1 // pred_fallthru
      _
    // Predicated region
    $region42: #{tpu_custom_call.1} parent=1 // pred_check
      _
    $region43: #{tpu_custom_call.1} parent=1 // pred_check_branch
      %585 = sbr.rel (0) target = $region45
    $region44: #{tpu_custom_call.1} parent=1 // pred_region
      %586 = dma.done [#allocation4], 128
    $region45: #{tpu_custom_call.1} parent=1 // pred_fallthru
      _
    %587 = vsyncpa [#allocation3], 1
    %588 = vsyncpa [#allocation6], 1
    %589 = vsyncpa [#allocation9], 1
    %590 = vsyncpa [#allocation4], 1

</llo_original>
